<compile_context>
chip_gen: v7x
topology: tpu7x:2x2x1
jax: 0.10.0
libtpu: 0.0.40
codegen_flags: <defaults>
</compile_context>

<pallas_src>
import functools

import jax
import jax.numpy as jnp
from jax import lax
from jax.experimental import pallas as pl
from jax.experimental.pallas import tpu as pltpu


def _cnn_kernel(NB, L_out, C_out, ll_ref, xin_ref, wconv_ref, wfc_ref, bfc_ref,
                x3_ref, x1_ref):
    g = pl.program_id(0)
    nbl = C_out * L_out

    # Conv1d (+ bias, folded into wconv_big) for NB samples: one MXU matmul.
    acc = jnp.dot(xin_ref[0], wconv_ref[...],
                  preferred_element_type=jnp.float32)      # (NB, C_out*L_out)

    # Optional length masking: zero positions l >= list_length[b] per sample.
    pos = lax.broadcasted_iota(jnp.int32, (NB, nbl), 1) % L_out
    row = lax.broadcasted_iota(jnp.int32, (NB, nbl), 0)
    thresh = jnp.full((NB, nbl), L_out, jnp.int32)
    for n in range(NB):                                    # static unroll, NB <= 8
        thresh = jnp.where(row == n, ll_ref[g * NB + n], thresh)
    x1 = jnp.where(pos < thresh, acc, 0.0)
    x1_ref[0] = x1                                         # lane-dense (NB, 128) store

    # ReLU -> AdaptiveAvgPool1d(1) -> Linear, pooling + 1/L_out folded into wfc_big.
    x2 = jnp.maximum(x1, 0.0)
    x3_ref[0] = jnp.dot(x2, wfc_ref[...],
                        preferred_element_type=jnp.float32) + bfc_ref[...]


def one_d_cnn_classifier(x, params, list_length=None):
    w_conv, b_conv, w_fc, b_fc = params
    B, C_in, L = x.shape
    C_out, _, K = w_conv.shape
    F = w_fc.shape[0]
    pad = (K - 1) // 2
    L_out = L + 2 * pad - K + 1
    L_pad = L + 2 * pad

    # Batch blocking: NB samples per grid step.  Cap at 8 and keep >= 2 grid
    # blocks when B >= 2 so both v7x TensorCores get a block; on v5e/v6e the
    # per-step overhead is still amortized NB-fold once B grows.
    NB = min(8, pl.cdiv(B, 2)) if B >= 2 else 1
    G = pl.cdiv(B, NB)
    B_pad = G * NB

    x = x.astype(jnp.float32)

    # --- Fold Conv1d into one dense (Toeplitz) matmul weight + bias row. ---
    p_idx = jnp.arange(L_pad)
    l_idx = jnp.arange(L_out)
    kk = p_idx[:, None] - l_idx[None, :]                   # (L_pad, L_out)
    valid = ((kk >= 0) & (kk < K)).astype(jnp.float32)
    kk_c = jnp.clip(kk, 0, K - 1)
    w_t = jnp.transpose(w_conv.astype(jnp.float32), (1, 2, 0))     # (C_in, K, C_out)
    toepl = w_t[:, kk_c, :] * valid[None, :, :, None]              # (C_in, L_pad, L_out, C_out)
    M = jnp.transpose(toepl, (0, 1, 3, 2)).reshape(C_in * L_pad, C_out * L_out)
    bias_row = jnp.repeat(b_conv.astype(jnp.float32), L_out)[None, :]
    wconv_big = jnp.concatenate([M, bias_row], axis=0)             # (C_in*L_pad+1, NBL)

    # --- Fold AdaptiveAvgPool1d(1) (1/L_out) + pooling reduce into fc weight. ---
    wfc_big = jnp.repeat(w_fc.T.astype(jnp.float32), L_out, axis=0) / float(L_out)  # (NBL, F)
    bfc_r = b_fc.reshape(1, F).astype(jnp.float32)

    # --- Inputs: flattened padded samples + ones column (drives the bias row). ---
    xpad = jnp.pad(x, ((0, B_pad - B), (0, 0), (pad, pad)))        # (B_pad, C_in, L_pad)
    xin = xpad.reshape(B_pad, C_in * L_pad)
    xin = jnp.concatenate([xin, jnp.ones((B_pad, 1), jnp.float32)], axis=1)
    CL1 = C_in * L_pad + 1
    xin = xin.reshape(G, NB, CL1)

    if list_length is None:
        ll = jnp.full((B_pad,), L_out, dtype=jnp.int32)            # no masking
    else:
        ll = jnp.pad(list_length.astype(jnp.int32), (0, B_pad - B),
                     constant_values=L_out)

    NBL = C_out * L_out
    kernel = functools.partial(_cnn_kernel, NB, L_out, C_out)

    x3_blk, x1_blk = pl.pallas_call(
        kernel,
        out_shape=(
            jax.ShapeDtypeStruct((G, NB, F), jnp.float32),
            jax.ShapeDtypeStruct((G, NB, NBL), jnp.float32),
        ),
        grid_spec=pltpu.PrefetchScalarGridSpec(
            num_scalar_prefetch=1,
            grid=(G,),
            in_specs=[
                pl.BlockSpec((1, NB, CL1), lambda g, ll: (g, 0, 0)),
                # Constant index_maps -> weights stay VMEM-resident across steps.
                pl.BlockSpec((CL1, NBL), lambda g, ll: (0, 0)),
                pl.BlockSpec((NBL, F), lambda g, ll: (0, 0)),
                pl.BlockSpec((1, F), lambda g, ll: (0, 0)),
            ],
            out_specs=[
                pl.BlockSpec((1, NB, F), lambda g, ll: (g, 0, 0)),
                pl.BlockSpec((1, NB, NBL), lambda g, ll: (g, 0, 0)),
            ],
        ),
        compiler_params=pltpu.CompilerParams(
            dimension_semantics=("parallel",)),
    )(ll, xin, wconv_big, wfc_big, bfc_r)

    x3 = x3_blk.reshape(B_pad, F)[:B]
    x1 = x1_blk.reshape(B_pad, C_out, L_out)[:B]
    return x3, x1


def reference(x, params, list_length=None):
    """Pure-JAX reference matching the PyTorch forward."""
    w_conv, b_conv, w_fc, b_fc = params
    x = x.astype(jnp.float32)
    pad = (w_conv.shape[2] - 1) // 2
    x1 = lax.conv_general_dilated(
        x, w_conv, window_strides=(1,), padding=[(pad, pad)],
        dimension_numbers=("NCH", "OIH", "NCH")) + b_conv[None, :, None]
    if list_length is not None:
        L_out = x1.shape[2]
        pos = jnp.arange(L_out)[None, None, :]
        x1 = jnp.where(pos < list_length[:, None, None], x1, 0.0)
    x2 = jnp.maximum(x1, 0.0)
    x3 = jnp.mean(x2, axis=2)
    x3 = x3 @ w_fc.T + b_fc
    return x3, x1


if __name__ == "__main__":
    # Module hyperparams: in_channels=4, out_channels=8, kernel_size=3,
    # input_size(L)=16, feature_size=32; batch=2.
    B, C_in, C_out, K, L, F = 2, 4, 8, 3, 16, 32

    key = jax.random.PRNGKey(0)
    k1, k2, k3, k4, k5 = jax.random.split(key, 5)
    x = jax.random.normal(k1, (B, C_in, L), dtype=jnp.float32)
    w_conv = jax.random.normal(k2, (C_out, C_in, K), dtype=jnp.float32) * 0.1
    b_conv = jax.random.normal(k3, (C_out,), dtype=jnp.float32) * 0.1
    w_fc = jax.random.normal(k4, (F, C_out), dtype=jnp.float32) * 0.1
    b_fc = jax.random.normal(k5, (F,), dtype=jnp.float32) * 0.1
    params = (w_conv, b_conv, w_fc, b_fc)

    # Path 1: with the optional list_length masking.
    list_length = jnp.array([12, 16], dtype=jnp.int32)
    x3, x1 = one_d_cnn_classifier(x, params, list_length)
    jax.block_until_ready((x3, x1))
    x3_ref, x1_ref = reference(x, params, list_length)
    assert x3.shape == (B, F) and x1.shape == (B, C_out, L)
    assert jnp.allclose(x3, x3_ref, atol=1e-3, rtol=1e-3)
    assert jnp.allclose(x1, x1_ref, atol=1e-3, rtol=1e-3)

    # Path 2: no masking.
    x3n, x1n = one_d_cnn_classifier(x, params, None)
    jax.block_until_ready((x3n, x1n))
    x3n_ref, x1n_ref = reference(x, params, None)
    assert jnp.allclose(x3n, x3n_ref, atol=1e-3, rtol=1e-3)
    assert jnp.allclose(x1n, x1n_ref, atol=1e-3, rtol=1e-3)

    print("KERNEL_OK")
</pallas_src>

<mosaic_0001>
module attributes {stable_mosaic.version = 11 : i64} {
  func.func @_cnn_kernel(%arg0: i32, %arg1: memref<2xi32, #tpu.memory_space<smem>>, %arg2: memref<1x1x73xf32, #tpu.memory_space<vmem>>, %arg3: memref<73x128xf32, #tpu.memory_space<vmem>>, %arg4: memref<128x32xf32, #tpu.memory_space<vmem>>, %arg5: memref<1x32xf32, #tpu.memory_space<vmem>>, %arg6: memref<1x1x32xf32, #tpu.memory_space<vmem>>, %arg7: memref<1x1x128xf32, #tpu.memory_space<vmem>>) attributes {dimension_semantics = [#tpu.dimension_semantics<parallel>], iteration_bounds = array<i64: 2>, scalar_prefetch = 1 : i64, scratch_operands = 0 : i64, tpu.core_type = #tpu.core_type<tc>, window_params = [{transform_indices = @transform_0, window_bounds = array<i64: 1, 1, 73>}, {pipeline_mode = #tpu.pipeline_mode<synchronous>, transform_indices = @transform_1, window_bounds = array<i64: 73, 128>}, {pipeline_mode = #tpu.pipeline_mode<synchronous>, transform_indices = @transform_2, window_bounds = array<i64: 128, 32>}, {pipeline_mode = #tpu.pipeline_mode<synchronous>, transform_indices = @transform_3, window_bounds = array<i64: 1, 32>}, {transform_indices = @transform_4, window_bounds = array<i64: 1, 1, 32>}, {transform_indices = @transform_5, window_bounds = array<i64: 1, 1, 128>}]} {
    %c0 = arith.constant 0 : index
    %c0_0 = arith.constant 0 : index
    %c0_1 = arith.constant 0 : index
    %0 = vector.load %arg2[%c0, %c0_0, %c0_1] : memref<1x1x73xf32, #tpu.memory_space<vmem>>, vector<1x1x73xf32>
    %1 = vector.shape_cast %0 : vector<1x1x73xf32> to vector<1x73xf32>
    %c0_2 = arith.constant 0 : index
    %c0_3 = arith.constant 0 : index
    %2 = vector.load %arg3[%c0_2, %c0_3] : memref<73x128xf32, #tpu.memory_space<vmem>>, vector<73x128xf32>
    %cst = arith.constant dense<0.000000e+00> : vector<1x128xf32>
    %3 = tpu.matmul %1, %2, %cst {dimension_numbers = #tpu.dot_dimension_numbers<[1], [0], [0], [1], [0, 0, 1, 1], [], []>} : vector<1x73xf32>, vector<73x128xf32>, vector<1x128xf32> -> vector<1x128xf32>
    %4 = tpu.iota {dimensions = array<i32: 1>} : vector<1x128xi32>
    %c16_i32 = arith.constant 16 : i32
    %c0_i32 = arith.constant 0 : i32
    %5 = arith.cmpi eq, %c16_i32, %c0_i32 : i32
    %c1_i32 = arith.constant 1 : i32
    %6 = arith.select %5, %c1_i32, %c16_i32 : i32
    %7 = vector.broadcast %6 : i32 to vector<1x128xi32>
    %8 = arith.remsi %4, %7 : vector<1x128xi32>
    %c0_i32_4 = arith.constant 0 : i32
    %9 = vector.broadcast %c0_i32_4 : i32 to vector<1x128xi32>
    %10 = arith.cmpi ne, %8, %9 : vector<1x128xi32>
    %c0_i32_5 = arith.constant 0 : i32
    %11 = vector.broadcast %c0_i32_5 : i32 to vector<1x128xi32>
    %12 = arith.cmpi slt, %8, %11 : vector<1x128xi32>
    %c0_i32_6 = arith.constant 0 : i32
    %13 = arith.cmpi slt, %6, %c0_i32_6 : i32
    %14 = vector.broadcast %13 : i1 to vector<1x128xi1>
    %15 = vector.broadcast %14 : vector<1x128xi1> to vector<1x128xi1>
    %16 = arith.xori %12, %15 : vector<1x128xi1>
    %17 = arith.andi %16, %10 : vector<1x128xi1>
    %18 = vector.broadcast %6 : i32 to vector<1x128xi32>
    %19 = arith.addi %8, %18 : vector<1x128xi32>
    %20 = arith.select %17, %19, %8 : vector<1x128xi1>, vector<1x128xi32>
    %21 = tpu.iota {dimensions = array<i32: 0>} : vector<1x128xi32>
    %c16_i32_7 = arith.constant 16 : i32
    %22 = vector.broadcast %c16_i32_7 : i32 to vector<1x128xi32>
    %c0_i32_8 = arith.constant 0 : i32
    %23 = vector.broadcast %c0_i32_8 : i32 to vector<1x128xi32>
    %24 = arith.cmpi eq, %21, %23 : vector<1x128xi32>
    %c1_i32_9 = arith.constant 1 : i32
    %25 = arith.muli %arg0, %c1_i32_9 : i32
    %c0_i32_10 = arith.constant 0 : i32
    %26 = arith.addi %25, %c0_i32_10 : i32
    %27 = arith.index_cast %26 : i32 to index
    %28 = memref.load %arg1[%27] : memref<2xi32, #tpu.memory_space<smem>>
    %29 = vector.broadcast %28 : i32 to vector<1x128xi32>
    %30 = arith.select %24, %29, %22 : vector<1x128xi1>, vector<1x128xi32>
    %31 = arith.cmpi slt, %20, %30 : vector<1x128xi32>
    %cst_11 = arith.constant 0.000000e+00 : f32
    %32 = vector.broadcast %cst_11 : f32 to vector<1x128xf32>
    %33 = arith.select %31, %3, %32 : vector<1x128xi1>, vector<1x128xf32>
    %c0_12 = arith.constant 0 : index
    %c0_13 = arith.constant 0 : index
    %c0_14 = arith.constant 0 : index
    %34 = vector.load %arg7[%c0_12, %c0_13, %c0_14] : memref<1x1x128xf32, #tpu.memory_space<vmem>>, vector<1x1x128xf32>
    %35 = vector.shape_cast %34 : vector<1x1x128xf32> to vector<1x128xf32>
    %36 = vector.shape_cast %33 : vector<1x128xf32> to vector<1x1x128xf32>
    tpu.vector_store %arg7[%c0_12, %c0_13, %c0_14], %36 {strides = array<i32>} : memref<1x1x128xf32, #tpu.memory_space<vmem>>, vector<1x1x128xf32>,
    %cst_15 = arith.constant 0.000000e+00 : f32
    %37 = vector.broadcast %cst_15 : f32 to vector<1x128xf32>
    %38 = arith.maximumf %33, %37 : vector<1x128xf32>
    %c0_16 = arith.constant 0 : index
    %c0_17 = arith.constant 0 : index
    %39 = vector.load %arg4[%c0_16, %c0_17] : memref<128x32xf32, #tpu.memory_space<vmem>>, vector<128x32xf32>
    %cst_18 = arith.constant dense<0.000000e+00> : vector<1x32xf32>
    %40 = tpu.matmul %38, %39, %cst_18 {dimension_numbers = #tpu.dot_dimension_numbers<[1], [0], [0], [1], [0, 0, 1, 1], [], []>} : vector<1x128xf32>, vector<128x32xf32>, vector<1x32xf32> -> vector<1x32xf32>
    %c0_19 = arith.constant 0 : index
    %c0_20 = arith.constant 0 : index
    %41 = vector.load %arg5[%c0_19, %c0_20] : memref<1x32xf32, #tpu.memory_space<vmem>>, vector<1x32xf32>
    %42 = arith.addf %40, %41 : vector<1x32xf32>
    %c0_21 = arith.constant 0 : index
    %c0_22 = arith.constant 0 : index
    %c0_23 = arith.constant 0 : index
    %43 = vector.load %arg6[%c0_21, %c0_22, %c0_23] : memref<1x1x32xf32, #tpu.memory_space<vmem>>, vector<1x1x32xf32>
    %44 = vector.shape_cast %43 : vector<1x1x32xf32> to vector<1x32xf32>
    %45 = vector.shape_cast %42 : vector<1x32xf32> to vector<1x1x32xf32>
    tpu.vector_store %arg6[%c0_21, %c0_22, %c0_23], %45 {strides = array<i32>} : memref<1x1x32xf32, #tpu.memory_space<vmem>>, vector<1x1x32xf32>,
    return
  }
  func.func @transform_0(%arg0: i32, %arg1: memref<2xi32, #tpu.memory_space<smem>>) -> (i32, i32, i32) {
    %c0_i32 = arith.constant 0 : i32
    %c0_i32_0 = arith.constant 0 : i32
    %c0_i32_1 = arith.constant 0 : i32
    return %arg0, %c0_i32, %c0_i32_0 : i32, i32, i32
  }
  func.func @transform_1(%arg0: i32, %arg1: memref<2xi32, #tpu.memory_space<smem>>) -> (i32, i32) {
    %c0_i32 = arith.constant 0 : i32
    %c0_i32_0 = arith.constant 0 : i32
    %c0_i32_1 = arith.constant 0 : i32
    return %c0_i32, %c0_i32_0 : i32, i32
  }
  func.func @transform_2(%arg0: i32, %arg1: memref<2xi32, #tpu.memory_space<smem>>) -> (i32, i32) {
    %c0_i32 = arith.constant 0 : i32
    %c0_i32_0 = arith.constant 0 : i32
    %c0_i32_1 = arith.constant 0 : i32
    return %c0_i32, %c0_i32_0 : i32, i32
  }
  func.func @transform_3(%arg0: i32, %arg1: memref<2xi32, #tpu.memory_space<smem>>) -> (i32, i32) {
    %c0_i32 = arith.constant 0 : i32
    %c0_i32_0 = arith.constant 0 : i32
    %c0_i32_1 = arith.constant 0 : i32
    return %c0_i32, %c0_i32_0 : i32, i32
  }
  func.func @transform_4(%arg0: i32, %arg1: memref<2xi32, #tpu.memory_space<smem>>) -> (i32, i32, i32) {
    %c0_i32 = arith.constant 0 : i32
    %c0_i32_0 = arith.constant 0 : i32
    %c0_i32_1 = arith.constant 0 : i32
    return %arg0, %c0_i32, %c0_i32_0 : i32, i32, i32
  }
  func.func @transform_5(%arg0: i32, %arg1: memref<2xi32, #tpu.memory_space<smem>>) -> (i32, i32, i32) {
    %c0_i32 = arith.constant 0 : i32
    %c0_i32_0 = arith.constant 0 : i32
    %c0_i32_1 = arith.constant 0 : i32
    return %arg0, %c0_i32, %c0_i32_0 : i32, i32, i32
  }
}

</mosaic_0001>

<llo_original>
// kernel: tpu_custom_call.1
$region0: #{tpu_custom_call.1}
  #allocation0 [shape = 'u32[]', space=smem, size = 0x4, offset = 0x4, fixed_abs, tag = 'smem constant byte address 0x4 - core index']
  #allocation1 [shape = 'u32[144,128]{1,0:T(1,128)}', space=vmem, size = 0x12000, scoped, tag = 'internal scratch']
  #allocation2 [shape = 's32[1]{0}', space=sflag, size = 0x4, scoped, tag = 'scoped memory for tpu_custom_call.1']
  #allocation3 [shape = 'u8[512]{0}', space=smem, size = 0x200, scoped, tag = 'prefetched SMEM operand 0']
  %s0 = inlined_call_operand.vmem [shape: s32[2], index: 0, kind: input, shape index: {}]
  %s1 = inlined_call_operand.vmem [shape: f32[2,1,73], index: 1, kind: input, shape index: {}]
  %s2 = inlined_call_operand.vmem [shape: f32[73,128], index: 2, kind: input, shape index: {}]
  %s3 = inlined_call_operand.vmem [shape: f32[128,32], index: 3, kind: input, shape index: {}]
  %s4 = inlined_call_operand.vmem [shape: f32[1,32], index: 4, kind: input, shape index: {}]
  %s5 = inlined_call_operand.hbm [shape: f32[2,1,32], index: 5, kind: output, shape index: {0}]
  %s6 = inlined_call_operand.hbm [shape: f32[2,1,128], index: 6, kind: output, shape index: {1}]
  %7 = xla_tuple %s5, %s6
  %s8 = sld [smem:[#allocation0]]
  $region57: #{tpu_custom_call.1} parent=0
    _
  %s10 = ssub.s32 1, %s8
  %s11 = scalar_select 0, %s10, %s8
  %s12 = sshll.u32 %s0, 4
  %s13 = int_to_ptr.vmem [resolvable:$true] %s12
  %15 = dma.vmem_to_smem %s13, 16, [#allocation3], [#allocation2]
  %16 = dma.done [#allocation2], 16
  %17 = sfence
  $region1: #{tpu_custom_call.1} parent=0
    #allocation4 [shape = 'u8[1024]{0}', space=vmem, size = 0x400, scoped, tag = 'output window, operand 0']
    #allocation5 [shape = 's32[2]{0}', space=sflag, size = 0x8, scoped, tag = 'scoped memory for tpu_custom_call.1']
    #allocation6 [shape = 'u8[1024]{0}', space=vmem, size = 0x400, scoped, tag = 'output window, operand 1']
    #allocation7 [shape = 's32[2]{0}', space=sflag, size = 0x8, scoped, tag = 'scoped memory for tpu_custom_call.1']
    %18 = vsyncpa [#allocation5], 0
    %s19 = scalar_lea.sflag [#allocation5], 1
    %20 = vsyncpa %s19, 0
    %21 = vsyncpa [#allocation7], 0
    %s22 = scalar_lea.sflag [#allocation7], 1
    %23 = vsyncpa %s22, 0
    loop: start=0, step=1, limit=4
    $region2: #{tpu_custom_call.1} parent=1 // loop_pre_header
      _
    $region3: #{tpu_custom_call.1} parent=1 // loop_header
      %s25 = sphi 0, %s29
      %p26 = scmp.ge.s32.totalorder %s25, 4
      %s35 = sphi 0, %s37
      %s38 = sphi 0, %s35
      %s39 = sphi 0, %s38
      %s55 = sphi 0, %s39
      %s59 = sphi 0, %s59
      %s61 = sphi 0, %s59
      %s62 = sphi 0, %s61
      %s76 = sphi 0, %s62
      %s80 = sphi 0, %s80
      %s82 = sphi 0, %s80
      %s83 = sphi 0, %s82
      %s97 = sphi 0, %s83
      %s101 = sphi 0, %s101
      %s103 = sphi 0, %s101
      %s104 = sphi 0, %s103
      %s118 = sphi 0, %s104
      %s124 = sphi 0, %s126
      %s127 = sphi 0, %s124
      %s128 = sphi 0, %s127
      %s144 = sphi 0, %s128
      %s150 = sphi 0, %s152
      %s153 = sphi 0, %s150
      %s154 = sphi 0, %s153
      %s170 = sphi 0, %s154
    $region4: #{tpu_custom_call.1} parent=1 // loop_header_branch
      %28 = sbr.rel (%p26) target = $region8
    $region5: #{tpu_custom_call.1} parent=1 // loop_body
      %s30 = ssub.s32 %s25, 1
      %s31 = ssub.s32 %s25, 2
      %s32 = sadd.s32 %s25, 1
      %s33 = ssub.s32 %s25, %s32
      %p34 = scmp.eq.s32.totalorder %s33, 0
      %s36 = sadd.s32 %s35, 1
      %s37 = scalar_select %p34, %s35, %s36
      %p40 = pneg %p34
      %p41 = scmp.eq.s32.totalorder %s25, 1
      %p42 = por %p40, %p41
      %p43 = scmp.ne.s32.totalorder %s35, %s38
      %p44 = scmp.eq.s32.totalorder %s25, 0
      %p45 = por %p43, %p44
      %p46 = scmp.ne.s32.totalorder %s35, %s38
      %p47 = scmp.eq.s32.totalorder %s30, 1
      %p48 = por %p46, %p47
      %p49 = scmp.ne.s32.totalorder %s38, %s39
      %p50 = scmp.eq.s32.totalorder %s30, 0
      %p51 = por %p49, %p50
      %p52 = scmp.ne.s32.totalorder %s38, %s39
      %p53 = scmp.eq.s32.totalorder %s31, 1
      %p54 = por %p52, %p53
      %p56 = scmp.ne.s32.totalorder %s39, %s55
      %p57 = scmp.eq.s32.totalorder %s31, 0
      %p58 = por %p56, %p57
      %s60 = sadd.s32 %s59, 1
      %p63 = scmp.eq.s32.totalorder %s25, 1
      %p64 = scmp.ne.s32.totalorder %s59, %s61
      %p65 = scmp.eq.s32.totalorder %s25, 0
      %p66 = por %p64, %p65
      %p67 = scmp.ne.s32.totalorder %s59, %s61
      %p68 = scmp.eq.s32.totalorder %s30, 1
      %p69 = por %p67, %p68
      %p70 = scmp.ne.s32.totalorder %s61, %s62
      %p71 = scmp.eq.s32.totalorder %s30, 0
      %p72 = por %p70, %p71
      %p73 = scmp.ne.s32.totalorder %s61, %s62
      %p74 = scmp.eq.s32.totalorder %s31, 1
      %p75 = por %p73, %p74
      %p77 = scmp.ne.s32.totalorder %s62, %s76
      %p78 = scmp.eq.s32.totalorder %s31, 0
      %p79 = por %p77, %p78
      %s81 = sadd.s32 %s80, 1
      %p84 = scmp.eq.s32.totalorder %s25, 1
      %p85 = scmp.ne.s32.totalorder %s80, %s82
      %p86 = scmp.eq.s32.totalorder %s25, 0
      %p87 = por %p85, %p86
      %p88 = scmp.ne.s32.totalorder %s80, %s82
      %p89 = scmp.eq.s32.totalorder %s30, 1
      %p90 = por %p88, %p89
      %p91 = scmp.ne.s32.totalorder %s82, %s83
      %p92 = scmp.eq.s32.totalorder %s30, 0
      %p93 = por %p91, %p92
      %p94 = scmp.ne.s32.totalorder %s82, %s83
      %p95 = scmp.eq.s32.totalorder %s31, 1
      %p96 = por %p94, %p95
      %p98 = scmp.ne.s32.totalorder %s83, %s97
      %p99 = scmp.eq.s32.totalorder %s31, 0
      %p100 = por %p98, %p99
      %s102 = sadd.s32 %s101, 1
      %p105 = scmp.eq.s32.totalorder %s25, 1
      %p106 = scmp.ne.s32.totalorder %s101, %s103
      %p107 = scmp.eq.s32.totalorder %s25, 0
      %p108 = por %p106, %p107
      %p109 = scmp.ne.s32.totalorder %s101, %s103
      %p110 = scmp.eq.s32.totalorder %s30, 1
      %p111 = por %p109, %p110
      %p112 = scmp.ne.s32.totalorder %s103, %s104
      %p113 = scmp.eq.s32.totalorder %s30, 0
      %p114 = por %p112, %p113
      %p115 = scmp.ne.s32.totalorder %s103, %s104
      %p116 = scmp.eq.s32.totalorder %s31, 1
      %p117 = por %p115, %p116
      %p119 = scmp.ne.s32.totalorder %s104, %s118
      %p120 = scmp.eq.s32.totalorder %s31, 0
      %p121 = por %p119, %p120
      %s122 = ssub.s32 %s25, %s32
      %p123 = scmp.eq.s32.totalorder %s122, 0
      %s125 = sadd.s32 %s124, 1
      %s126 = scalar_select %p123, %s124, %s125
      %p129 = pneg %p123
      %p130 = scmp.eq.s32.totalorder %s25, 1
      %p131 = por %p129, %p130
      %p132 = scmp.ne.s32.totalorder %s124, %s127
      %p133 = scmp.eq.s32.totalorder %s25, 0
      %p134 = por %p132, %p133
      %p135 = scmp.ne.s32.totalorder %s124, %s127
      %p136 = scmp.eq.s32.totalorder %s30, 1
      %p137 = por %p135, %p136
      %p138 = scmp.ne.s32.totalorder %s127, %s128
      %p139 = scmp.eq.s32.totalorder %s30, 0
      %p140 = por %p138, %p139
      %p141 = scmp.ne.s32.totalorder %s127, %s128
      %p142 = scmp.eq.s32.totalorder %s31, 1
      %p143 = por %p141, %p142
      %p145 = scmp.ne.s32.totalorder %s128, %s144
      %p146 = scmp.eq.s32.totalorder %s31, 0
      %p147 = por %p145, %p146
      %s148 = ssub.s32 %s25, %s32
      %p149 = scmp.eq.s32.totalorder %s148, 0
      %s151 = sadd.s32 %s150, 1
      %s152 = scalar_select %p149, %s150, %s151
      %p155 = pneg %p149
      %p156 = scmp.eq.s32.totalorder %s25, 1
      %p157 = por %p155, %p156
      %p158 = scmp.ne.s32.totalorder %s150, %s153
      %p159 = scmp.eq.s32.totalorder %s25, 0
      %p160 = por %p158, %p159
      %p161 = scmp.ne.s32.totalorder %s150, %s153
      %p162 = scmp.eq.s32.totalorder %s30, 1
      %p163 = por %p161, %p162
      %p164 = scmp.ne.s32.totalorder %s153, %s154
      %p165 = scmp.eq.s32.totalorder %s30, 0
      %p166 = por %p164, %p165
      %p167 = scmp.ne.s32.totalorder %s153, %s154
      %p168 = scmp.eq.s32.totalorder %s31, 1
      %p169 = por %p167, %p168
      %p171 = scmp.ne.s32.totalorder %s154, %s170
      %p172 = scmp.eq.s32.totalorder %s31, 0
      %p173 = por %p171, %p172
      %p174 = scmp.le.s32.totalorder 1, %s25
      %p175 = scmp.lt.s32.totalorder %s25, 3
      %p176 = pnand %p174, %p175
      %p177 = pneg %p176
      // Predicated region
      $region9: #{tpu_custom_call.1} parent=5 // pred_check
        _
      $region10: #{tpu_custom_call.1} parent=5 // pred_check_branch
        %179 = sbr.rel (%p176) target = $region12
      $region11: #{tpu_custom_call.1} parent=5 // pred_region
        %s180 = ssub.s32 %s25, 1
        // Predicated region
        $region13: #{tpu_custom_call.1} parent=11 // pred_check
          %p181 = pneg %p72
        $region14: #{tpu_custom_call.1} parent=11 // pred_check_branch
          %183 = sbr.rel (%p181) target = $region16
        $region15: #{tpu_custom_call.1} parent=11 // pred_region
          _
        $region16: #{tpu_custom_call.1} parent=11 // pred_fallthru
          _
        // Predicated region
        $region17: #{tpu_custom_call.1} parent=11 // pred_check
          %p184 = pneg %p93
        $region18: #{tpu_custom_call.1} parent=11 // pred_check_branch
          %186 = sbr.rel (%p184) target = $region20
        $region19: #{tpu_custom_call.1} parent=11 // pred_region
          _
        $region20: #{tpu_custom_call.1} parent=11 // pred_fallthru
          _
        // Predicated region
        $region21: #{tpu_custom_call.1} parent=11 // pred_check
          %p187 = pneg %p114
        $region22: #{tpu_custom_call.1} parent=11 // pred_check_branch
          %189 = sbr.rel (%p187) target = $region24
        $region23: #{tpu_custom_call.1} parent=11 // pred_region
          _
        $region24: #{tpu_custom_call.1} parent=11 // pred_fallthru
          _
      $region12: #{tpu_custom_call.1} parent=5 // pred_fallthru
        _
      %p190 = scmp.lt.s32.totalorder %s25, 2
      // Predicated region
      $region25: #{tpu_custom_call.1} parent=5 // pred_check
        %p191 = pneg %p190
      $region26: #{tpu_custom_call.1} parent=5 // pred_check_branch
        %193 = sbr.rel (%p191) target = $region28
      $region27: #{tpu_custom_call.1} parent=5 // pred_region
        // Predicated region
        $region29: #{tpu_custom_call.1} parent=27 // pred_check
          %p194 = pneg %p45
        $region30: #{tpu_custom_call.1} parent=27 // pred_check_branch
          %196 = sbr.rel (%p194) target = $region32
        $region31: #{tpu_custom_call.1} parent=27 // pred_region
          %p197 = scmp.lt.s32.totalorder %s25, 1
          %s198 = scalar_select %p197, %s25, 1
          %s199 = scalar_lea.vmem %s1, %s198
        $region32: #{tpu_custom_call.1} parent=27 // pred_fallthru
          _
      $region28: #{tpu_custom_call.1} parent=5 // pred_fallthru
        _
      %p200 = scmp.le.s32.totalorder 1, %s25
      %p201 = scmp.lt.s32.totalorder %s25, 3
      %p202 = pnand %p200, %p201
      %p203 = pneg %p202
      // Predicated region
      $region33: #{tpu_custom_call.1} parent=5 // pred_check
        _
      $region34: #{tpu_custom_call.1} parent=5 // pred_check_branch
        %205 = sbr.rel (%p202) target = $region36
      $region35: #{tpu_custom_call.1} parent=5 // pred_region
        %s206 = ssub.s32 %s25, 1
        %p207 = scmp.lt.s32.totalorder %s30, 1
        %s208 = scalar_select %p207, %s30, 1
        %s209 = scalar_lea.vmem %s1, %s208
        %p210 = pneg %p51
        %p211 = pneg %p48
        %p212 = pneg %p72
        %p213 = pneg %p69
        %p214 = pneg %p93
        %p215 = pneg %p90
        %p216 = pneg %p114
        %p217 = pneg %p111
        %p218 = pneg %p140
        %p219 = pneg %p137
        %s220 = sand.u32 %s127, 1
        %s221 = scalar_lea.sflag [#allocation5], %s220
        %s222 = sand.u32 %s127, 1
        %s223 = scalar_lea.vmem [#allocation4], %s222
        %p224 = pneg %p166
        %p225 = pneg %p163
        %s226 = sand.u32 %s153, 1
        %s227 = scalar_lea.sflag [#allocation7], %s226
        %s228 = sand.u32 %s153, 1
        %s229 = scalar_lea.vmem [#allocation6], %s228
        %p230 = scmp.lt.s32.totalorder %s30, 1
        %s231 = scalar_select %p230, %s30, 1
        %s232 = scalar_lea.vmem %s1, %s231
        %v233 = vld [vmem:[%s232] sm:$0x1]
        %v234 = vld [vmem:[%s2] sm:$0xff]
        %v235 = vld [vmem:[%s2 + $0x8] sm:$0xff]
        %v236 = vld [vmem:[%s2 + $0x10] sm:$0xff]
        %v237 = vld [vmem:[%s2 + $0x18] sm:$0xff]
        %v238 = vld [vmem:[%s2 + $0x20] sm:$0xff]
        %v239 = vld [vmem:[%s2 + $0x28] sm:$0xff]
        %v240 = vld [vmem:[%s2 + $0x30] sm:$0xff]
        %v241 = vld [vmem:[%s2 + $0x38] sm:$0xff]
        %v242 = vld [vmem:[%s2 + $0x40] sm:$0xff]
        %v243 = vld [vmem:[%s2 + $0x48] sm:$0x1]
        %vm244 = vcmask 596992
        %v246 = vsel %vm244, %v233, 0
        %vm248 = vcmask 1040384
        %v250 = vsel %vm248, %v243, 0
        %252 = vmatprep.subr.mxu0 0.0
        %253 = vmatpush1.msra.mxu0 %v234
        %254 = vmatprep.subr.mxu0 0.0
        %255 = vmatpush1.msra.mxu0 %v235
        %256 = vmatprep.subr.mxu0 0.0
        %257 = vmatpush1.msra.mxu0 %v236
        %258 = vmatprep.subr.mxu0 0.0
        %259 = vmatpush1.msra.mxu0 %v237
        %260 = vmatprep.subr.mxu0 0.0
        %261 = vmatpush1.msra.mxu0 %v238
        %262 = vmatprep.subr.mxu0 0.0
        %263 = vmatpush1.msra.mxu0 %v239
        %264 = vmatprep.subr.mxu0 0.0
        %265 = vmatpush1.msra.mxu0 %v240
        %266 = vmatprep.subr.mxu0 0.0
        %267 = vmatpush1.msra.mxu0 %v241
        %268 = vmatprep.subr.mxu0 0.0
        %269 = vmatpush1.msra.mxu0 %v242
        %270 = vmatprep.subr.mxu0 0.0
        %271 = vmatpush1.msra.mxu0 %v250
        %272 = vmatprep.subr.mxu0 0.0
        %273 = vmatpush1.msra.mxu0 0.0
        %274 = vmatprep.subr.mxu0 0.0
        %275 = vmatpush1.msra.mxu0 0.0
        %276 = vmatprep.subr.mxu0 0.0
        %277 = vmatpush1.msra.mxu0 0.0
        %278 = vmatprep.subr.mxu0 0.0
        %279 = vmatpush1.msra.mxu0 0.0
        %280 = vmatprep.subr.mxu0 0.0
        %281 = vmatpush1.msra.mxu0 0.0
        %282 = vmatprep.subr.mxu0 0.0
        %283 = vmatpush1.msra.mxu0 0.0
        %284 = vmatprep.subr.mxu0 0.0
        %285 = vmatpush1.msra.mxu0 0.0
        %286 = vmatprep.subr.mxu0 0.0
        %287 = vmatpush1.msra.mxu0 0.0
        %288 = vmatprep.subr.mxu0 0.0
        %289 = vmatpush1.msra.mxu0 0.0
        %290 = vmatprep.subr.mxu0 0.0
        %291 = vmatpush1.msra.mxu0 0.0
        %292 = vmatprep.subr.mxu0 0.0
        %293 = vmatpush1.msra.mxu0 0.0
        %294 = vmatprep.subr.mxu0 0.0
        %295 = vmatpush1.msra.mxu0 0.0
        %296 = vmatprep.subr.mxu0 0.0
        %297 = vmatpush1.msra.mxu0 0.0
        %298 = vmatprep.subr.mxu0 0.0
        %299 = vmatpush1.msra.mxu0 0.0
        %300 = vmatprep.subr.mxu0 0.0
        %301 = vmatpush1.msra.mxu0 0.0
        %302 = vmatprep.subr.mxu0 0.0
        %303 = vmatpush1.msra.mxu0 0.0
        %304 = vmatprep.subr.mxu0 0.0
        %305 = vmatpush1.msra.mxu0 0.0
        %306 = vmatprep.subr.mxu0 0.0
        %307 = vmatpush1.msra.mxu0 0.0
        %308 = vmatprep.subr.mxu0 0.0
        %309 = vmatpush1.msra.mxu0 0.0
        %310 = vmatprep.subr.mxu0 0.0
        %311 = vmatpush1.msra.mxu0 0.0
        %312 = vmatprep.subr.mxu0 0.0
        %313 = vmatpush1.msra.mxu0 0.0
        %314 = vmatprep.subr.mxu0 0.0
        %315 = vmatpush1.msra.mxu0 0.0
        %316 = vmatprep.mubr.f32.mxu0 0.0
        %317 = vmatmul.mubr.f32.gmra.mrb[0].mxu0 %v246
        %v318 = vpop.f32.mrb[0].mxu0
        %v319 = vadd.f32 0.0, %v318
        %v320 = vpop.f32.mrb[0].mxu0
        %321 = vdwg.mxu0
        %v322 = vlaneseq
        %v323 = vand.u32 %v322, 127
        %vm324 = vcmp.lt.s32.totalorder %v323, 0
        %v325 = vsub.s32 0, %v323
        %v326 = vsel %vm324, %v325, %v323
        %v327 = vshrl.u32 %v326, 4
        %v328 = vand.u32 %v326, 15
        %v329 = vsub.s32 0, %v328
        %v330 = vsel %vm324, %v329, %v328
        %vm331 = vcmp.ne.s32.totalorder %v330, 0
        %vm332 = vcmp.lt.s32.totalorder %v330, 0
        %vm333 = vmand %vm332, %vm331
        %v334 = vadd.s32 %v330, 16
        %v335 = vsel %vm333, %v334, %v330
        %v336 = vlaneseq
        %v337 = vshrl.u32 %v336, 7
        %vm338 = vcmp.eq.s32.totalorder %v337, 0
        %s339 = sld [smem:[#allocation3 + %s30]]
        %v340 = vstv %s339
        %v341 = vsel %vm338, %v340, 16
        %vm342 = vcmp.lt.s32.totalorder %v335, %v341
        %v343 = vsel %vm342, %v319, 0.0
        %344 = vst [vmem:[%s229] sm:$0x1] %v343
        %v345 = vmax.f32 %v343, 0.0
        %v346 = vld [vmem:[%s3] sm:$0xff]
        %v347 = vld [vmem:[%s3 + $0x8] sm:$0xff]
        %v348 = vld [vmem:[%s3 + $0x10] sm:$0xff]
        %v349 = vld [vmem:[%s3 + $0x18] sm:$0xff]
        %v350 = vld [vmem:[%s3 + $0x20] sm:$0xff]
        %v351 = vld [vmem:[%s3 + $0x28] sm:$0xff]
        %v352 = vld [vmem:[%s3 + $0x30] sm:$0xff]
        %v353 = vld [vmem:[%s3 + $0x38] sm:$0xff]
        %v354 = vld [vmem:[%s3 + $0x40] sm:$0xff]
        %v355 = vld [vmem:[%s3 + $0x48] sm:$0xff]
        %v356 = vld [vmem:[%s3 + $0x50] sm:$0xff]
        %v357 = vld [vmem:[%s3 + $0x58] sm:$0xff]
        %v358 = vld [vmem:[%s3 + $0x60] sm:$0xff]
        %v359 = vld [vmem:[%s3 + $0x68] sm:$0xff]
        %v360 = vld [vmem:[%s3 + $0x70] sm:$0xff]
        %v361 = vld [vmem:[%s3 + $0x78] sm:$0xff]
        %v362 = vld [vmem:[%s4] sm:$0x1]
        %363 = vmatprep.subr.mxu0 0.0
        %364 = vmatpush1.msra.mxu0 %v346
        %365 = vmatprep.subr.mxu0 0.0
        %366 = vmatpush1.msra.mxu0 %v347
        %367 = vmatprep.subr.mxu0 0.0
        %368 = vmatpush1.msra.mxu0 %v348
        %369 = vmatprep.subr.mxu0 0.0
        %370 = vmatpush1.msra.mxu0 %v349
        %371 = vmatprep.subr.mxu0 0.0
        %372 = vmatpush1.msra.mxu0 %v350
        %373 = vmatprep.subr.mxu0 0.0
        %374 = vmatpush1.msra.mxu0 %v351
        %375 = vmatprep.subr.mxu0 0.0
        %376 = vmatpush1.msra.mxu0 %v352
        %377 = vmatprep.subr.mxu0 0.0
        %378 = vmatpush1.msra.mxu0 %v353
        %379 = vmatprep.subr.mxu0 0.0
        %380 = vmatpush1.msra.mxu0 %v354
        %381 = vmatprep.subr.mxu0 0.0
        %382 = vmatpush1.msra.mxu0 %v355
        %383 = vmatprep.subr.mxu0 0.0
        %384 = vmatpush1.msra.mxu0 %v356
        %385 = vmatprep.subr.mxu0 0.0
        %386 = vmatpush1.msra.mxu0 %v357
        %387 = vmatprep.subr.mxu0 0.0
        %388 = vmatpush1.msra.mxu0 %v358
        %389 = vmatprep.subr.mxu0 0.0
        %390 = vmatpush1.msra.mxu0 %v359
        %391 = vmatprep.subr.mxu0 0.0
        %392 = vmatpush1.msra.mxu0 %v360
        %393 = vmatprep.subr.mxu0 0.0
        %394 = vmatpush1.msra.mxu0 %v361
        %395 = vmatprep.subr.mxu0 0.0
        %396 = vmatpush1.msra.mxu0 0.0
        %397 = vmatprep.subr.mxu0 0.0
        %398 = vmatpush1.msra.mxu0 0.0
        %399 = vmatprep.subr.mxu0 0.0
        %400 = vmatpush1.msra.mxu0 0.0
        %401 = vmatprep.subr.mxu0 0.0
        %402 = vmatpush1.msra.mxu0 0.0
        %403 = vmatprep.subr.mxu0 0.0
        %404 = vmatpush1.msra.mxu0 0.0
        %405 = vmatprep.subr.mxu0 0.0
        %406 = vmatpush1.msra.mxu0 0.0
        %407 = vmatprep.subr.mxu0 0.0
        %408 = vmatpush1.msra.mxu0 0.0
        %409 = vmatprep.subr.mxu0 0.0
        %410 = vmatpush1.msra.mxu0 0.0
        %411 = vmatprep.subr.mxu0 0.0
        %412 = vmatpush1.msra.mxu0 0.0
        %413 = vmatprep.subr.mxu0 0.0
        %414 = vmatpush1.msra.mxu0 0.0
        %415 = vmatprep.subr.mxu0 0.0
        %416 = vmatpush1.msra.mxu0 0.0
        %417 = vmatprep.subr.mxu0 0.0
        %418 = vmatpush1.msra.mxu0 0.0
        %419 = vmatprep.subr.mxu0 0.0
        %420 = vmatpush1.msra.mxu0 0.0
        %421 = vmatprep.subr.mxu0 0.0
        %422 = vmatpush1.msra.mxu0 0.0
        %423 = vmatprep.subr.mxu0 0.0
        %424 = vmatpush1.msra.mxu0 0.0
        %425 = vmatprep.subr.mxu0 0.0
        %426 = vmatpush1.msra.mxu0 0.0
        %427 = vmatprep.mubr.f32.mxu0 0.0
        %428 = vmatmul.mubr.f32.gmra.mrb[0].mxu0 %v345
        %v429 = vpop.f32.mrb[0].mxu0
        %v430 = vadd.f32 %v362, %v429
        %v431 = vpop.f32.mrb[0].mxu0
        %432 = vdwg.mxu0
        %vm433 = vcmask 253952
        %434 = vst.msk [vmem:[%s223] sm:$0x1] %vm433, %v430
        %s435 = sand.u32 %s127, 1
        %s436 = scalar_lea.sflag [#allocation5], %s435
        %s437 = sand.u32 %s127, 1
        %s438 = scalar_lea.vmem [#allocation4], %s437
        %s439 = sand.u32 %s153, 1
        %s440 = scalar_lea.sflag [#allocation7], %s439
        %s441 = sand.u32 %s153, 1
        %s442 = scalar_lea.vmem [#allocation6], %s441
        // Predicated region
        $region37: #{tpu_custom_call.1} parent=35 // pred_check
          %p443 = pneg %p137
        $region38: #{tpu_custom_call.1} parent=35 // pred_check_branch
          %445 = sbr.rel (%p443) target = $region40
        $region39: #{tpu_custom_call.1} parent=35 // pred_region
          %s447 = ssub.s32 16, 16
          %448 = vsyncadd %s436, %s447
          %s449 = smul.addr %s30, 16
          %s450 = scalar_lea.hbm %s5, %s449
          %s452 = sshll.u32 %s438, 4
          %s453 = int_to_ptr.vmem [resolvable:$true] %s452
          %455 = dma.vmem_to_hbm [thread:$0]  %s453, 16, %s450, %s436
        $region40: #{tpu_custom_call.1} parent=35 // pred_fallthru
          _
        // Predicated region
        $region41: #{tpu_custom_call.1} parent=35 // pred_check
          %p456 = pneg %p163
        $region42: #{tpu_custom_call.1} parent=35 // pred_check_branch
          %458 = sbr.rel (%p456) target = $region44
        $region43: #{tpu_custom_call.1} parent=35 // pred_region
          %s460 = ssub.s32 16, 16
          %461 = vsyncadd %s440, %s460
          %s462 = smul.addr %s30, 16
          %s463 = scalar_lea.hbm %s6, %s462
          %s465 = sshll.u32 %s442, 4
          %s466 = int_to_ptr.vmem [resolvable:$true] %s465
          %468 = dma.vmem_to_hbm [thread:$0]  %s466, 16, %s463, %s440
        $region44: #{tpu_custom_call.1} parent=35 // pred_fallthru
          _
      $region36: #{tpu_custom_call.1} parent=5 // pred_fallthru
        _
      %p469 = scmp.le.s32.totalorder 2, %s25
      // Predicated region
      $region45: #{tpu_custom_call.1} parent=5 // pred_check
        %p470 = pneg %p469
      $region46: #{tpu_custom_call.1} parent=5 // pred_check_branch
        %472 = sbr.rel (%p470) target = $region48
      $region47: #{tpu_custom_call.1} parent=5 // pred_region
        %s473 = ssub.s32 %s25, 2
        // Predicated region
        $region49: #{tpu_custom_call.1} parent=47 // pred_check
          %p474 = pneg %p143
        $region50: #{tpu_custom_call.1} parent=47 // pred_check_branch
          %476 = sbr.rel (%p474) target = $region52
        $region51: #{tpu_custom_call.1} parent=47 // pred_region
          %s477 = sand.u32 %s128, 1
          %s478 = scalar_lea.sflag [#allocation5], %s477
          %s479 = sand.u32 %s128, 1
          %s480 = scalar_lea.vmem [#allocation4], %s479
          %481 = dma.done %s478, 16
        $region52: #{tpu_custom_call.1} parent=47 // pred_fallthru
          _
        // Predicated region
        $region53: #{tpu_custom_call.1} parent=47 // pred_check
          %p482 = pneg %p169
        $region54: #{tpu_custom_call.1} parent=47 // pred_check_branch
          %484 = sbr.rel (%p482) target = $region56
        $region55: #{tpu_custom_call.1} parent=47 // pred_region
          %s485 = sand.u32 %s154, 1
          %s486 = scalar_lea.sflag [#allocation7], %s485
          %s487 = sand.u32 %s154, 1
          %s488 = scalar_lea.vmem [#allocation6], %s487
          %489 = dma.done %s486, 16
        $region56: #{tpu_custom_call.1} parent=47 // pred_fallthru
          _
      $region48: #{tpu_custom_call.1} parent=5 // pred_fallthru
        _
    $region6: #{tpu_custom_call.1} parent=1 // loop_footer
      %s29 = sadd.s32 1, %s25
    $region7: #{tpu_custom_call.1} parent=1 // loop_footer_branch
      %24 = sbr.rel target = $region3
    $region8: #{tpu_custom_call.1} parent=1 // loop_exit
      _
    %490 = vsyncpa [#allocation5], 1
    %s491 = scalar_lea.sflag [#allocation5], 1
    %492 = vsyncpa %s491, 1
    %493 = vsyncpa [#allocation7], 1
    %s494 = scalar_lea.sflag [#allocation7], 1
    %495 = vsyncpa %s494, 1

</llo_original>
